<compile_context>
chip_gen: v5e
topology: v5e:2x2
jax: 0.10.0
libtpu: 0.0.40
codegen_flags: <defaults>
</compile_context>

<pallas_src>
import functools

import jax
import jax.numpy as jnp
from jax.experimental import pallas as pl
from jax.experimental.pallas import tpu as pltpu


def discriminator_kernel(seed_ref, x_ref, w1_ref, w2_ref, w3_ref, o_ref, *,
                         dropout_rate, matmul_dtype):
    # Per-tile salt: SMEM seed mixed with the grid index so every batch tile
    # draws an independent dropout mask.
    tile = pl.program_id(0).astype(jnp.uint32)
    salt = seed_ref[0].astype(jnp.uint32) ^ (tile * jnp.uint32(0x9E3779B9))

    x = x_ref[...].astype(jnp.float32)

    # --- one counter-hash drives BOTH dropout layers (hi/lo 16 bits) --------
    if dropout_rate > 0.0:
        r = jax.lax.broadcasted_iota(jnp.int32, x.shape, 0).astype(jnp.uint32)
        c = jax.lax.broadcasted_iota(jnp.int32, x.shape, 1).astype(jnp.uint32)
        h = r * jnp.uint32(0x9E3779B1) + c * jnp.uint32(0x85EBCA77) + salt
        h = h ^ (h >> 16)
        h = h * jnp.uint32(0x7FEB352D)
        h = h ^ (h >> 15)
        h = h * jnp.uint32(0x846CA68B)
        h = h ^ (h >> 16)
        thresh = jnp.uint32(min(int(round(dropout_rate * 65536.0)), 65535))
        keep1 = (h >> 16) >= thresh                 # P(keep) ~= 1 - rate
        keep2 = (h & jnp.uint32(0xFFFF)) >= thresh
        scale = 1.0 / (1.0 - dropout_rate)

    def mm(a, w_ref):
        # Weights are pre-cast in the wrapper; only cast activations if needed.
        if matmul_dtype != jnp.dtype(jnp.float32):
            a = a.astype(matmul_dtype)
        return jnp.dot(a, w_ref[...], preferred_element_type=jnp.float32)

    # --- dense_1 + relu + dropout + residual --------------------------------
    h1 = jnp.maximum(mm(x, w1_ref), 0.0)
    if dropout_rate > 0.0:
        h1 = jnp.where(keep1, h1 * scale, 0.0)
    x1 = h1 + x

    # --- dense_2 + relu + dropout + residual --------------------------------
    h2 = jnp.maximum(mm(x1, w2_ref), 0.0)
    if dropout_rate > 0.0:
        h2 = jnp.where(keep2, h2 * scale, 0.0)
    x2 = h2 + x1

    # --- dense_3 on the MXU: (8, d) x (tile_n, d)^T -> (8, tile_n), row 0 ----
    # Produces a lane-dense logits row directly (no relayout, no VPU reduce).
    logits8 = jnp.einsum('kd,nd->kn', w3_ref[...].astype(jnp.float32), x2,
                         preferred_element_type=jnp.float32)
    logits = logits8[0:1, :]                        # (1, tile_n)
    sig = 1.0 / (1.0 + jnp.exp(-logits))            # exp on EUP; divide only
                                                    # touches tile_n values.
    o_ref[...] = sig.astype(o_ref.dtype)            # lane-packed, unmasked vst


def discriminator_forward(x, w1, w2, w3, seed, dropout_rate, *,
                          tile_n=512, matmul_dtype=jnp.float32):
    n, d = x.shape
    assert w1.shape == (d, d) and w2.shape == (d, d) and w3.shape == (d, 1)
    matmul_dtype = jnp.dtype(matmul_dtype)

    # Lane-packed output => batch padded / tiled in multiples of 128.
    # (v5e/v6e: prefer a single big tile; v7x: use >=2 tiles for both TCs.)
    n_pad128 = pl.cdiv(n, 128) * 128
    tile_n = max(128, (int(tile_n) // 128) * 128)
    tile_n = min(tile_n, n_pad128)
    n_pad = pl.cdiv(n, tile_n) * tile_n
    num_tiles = n_pad // tile_n
    x_p = jnp.pad(x, ((0, n_pad - n), (0, 0))) if n_pad != n else x

    # Pre-cast square weights ONCE (no per-tile vcvt; halves weight traffic
    # when matmul_dtype=bf16).  W3 becomes an 8-row MXU operand (rows 1..7 = 0).
    w1_c = w1.astype(matmul_dtype)
    w2_c = w2.astype(matmul_dtype)
    w3_rows = jnp.zeros((8, d), jnp.float32).at[0].set(
        w3.reshape(d).astype(jnp.float32))

    kernel = functools.partial(discriminator_kernel,
                               dropout_rate=float(dropout_rate),
                               matmul_dtype=matmul_dtype)

    out_row = pl.pallas_call(
        kernel,
        out_shape=jax.ShapeDtypeStruct((1, n_pad), x.dtype),
        grid_spec=pltpu.PrefetchScalarGridSpec(
            num_scalar_prefetch=1,                       # seed -> SMEM
            grid=(num_tiles,),                           # pipelined batch tiles
            in_specs=[
                pl.BlockSpec((tile_n, d), lambda i, seed: (i, 0)),  # x tile
                pl.BlockSpec((d, d), lambda i, seed: (0, 0)),       # W1 (resident)
                pl.BlockSpec((d, d), lambda i, seed: (0, 0)),       # W2 (resident)
                pl.BlockSpec((8, d), lambda i, seed: (0, 0)),       # W3 rows (resident)
            ],
            out_specs=pl.BlockSpec((1, tile_n), lambda i, seed: (0, i)),
        ),
        compiler_params=pltpu.CompilerParams(
            dimension_semantics=("parallel",)),          # v7x: shard tiles over 2 TCs
    )(seed, x_p, w1_c, w2_c, w3_rows)

    return out_row[0, :n].reshape(n, 1)


if __name__ == "__main__":
    # Module "args", small and deterministic.
    hr_dim = 32
    batch = 256            # 2 grid tiles of 128 rows -> exercises the pipeline
    mean_dense = 0.0
    std_dense = 0.02
    dropout_rate = 0.1

    key = jax.random.PRNGKey(0)
    kx, k1, k2, k3 = jax.random.split(key, 4)

    x = jax.random.normal(kx, (batch, hr_dim), dtype=jnp.float32)
    # Parameters: normal(mean_dense, std_dense), matching nn.init.normal_.
    w1 = mean_dense + std_dense * jax.random.normal(k1, (hr_dim, hr_dim), jnp.float32)
    w2 = mean_dense + std_dense * jax.random.normal(k2, (hr_dim, hr_dim), jnp.float32)
    w3 = mean_dense + std_dense * jax.random.normal(k3, (hr_dim, 1), jnp.float32)

    seed = jnp.array([0], dtype=jnp.int32)   # dropout PRNG seed
    # TODO(synk): dropout mask stream is a counter hash keyed on (seed, tile,
    # row, col); it will never bit-match torch's RNG (acceptable for training).

    out = discriminator_forward(x, w1, w2, w3, seed, dropout_rate, tile_n=128)
    out = jax.block_until_ready(out)

    assert out.shape == (batch, 1)
    assert bool(jnp.all((out >= 0.0) & (out <= 1.0)))
    print("KERNEL_OK")
</pallas_src>

<mosaic_0001>
module attributes {stable_mosaic.version = 11 : i64} {
  func.func @discriminator_kernel(%arg0: i32, %arg1: memref<1xi32, #tpu.memory_space<smem>>, %arg2: memref<128x32xf32, #tpu.memory_space<vmem>>, %arg3: memref<32x32xf32, #tpu.memory_space<vmem>>, %arg4: memref<32x32xf32, #tpu.memory_space<vmem>>, %arg5: memref<8x32xf32, #tpu.memory_space<vmem>>, %arg6: memref<1x128xf32, #tpu.memory_space<vmem>>) attributes {dimension_semantics = [#tpu.dimension_semantics<parallel>], iteration_bounds = array<i64: 2>, scalar_prefetch = 1 : i64, scratch_operands = 0 : i64, tpu.core_type = #tpu.core_type<tc>, window_params = [{transform_indices = @transform_0, window_bounds = array<i64: 128, 32>}, {pipeline_mode = #tpu.pipeline_mode<synchronous>, transform_indices = @transform_1, window_bounds = array<i64: 32, 32>}, {pipeline_mode = #tpu.pipeline_mode<synchronous>, transform_indices = @transform_2, window_bounds = array<i64: 32, 32>}, {pipeline_mode = #tpu.pipeline_mode<synchronous>, transform_indices = @transform_3, window_bounds = array<i64: 8, 32>}, {transform_indices = @transform_4, window_bounds = array<i64: 1, 128>}]} {
    %c0 = arith.constant 0 : index
    %0 = memref.load %arg1[%c0] : memref<1xi32, #tpu.memory_space<smem>>
    %c-1640531527_i32 = arith.constant -1640531527 : i32
    %1 = arith.muli %arg0, %c-1640531527_i32 : i32
    %2 = arith.xori %0, %1 : i32
    %c0_0 = arith.constant 0 : index
    %c0_1 = arith.constant 0 : index
    %3 = vector.load %arg2[%c0_0, %c0_1] : memref<128x32xf32, #tpu.memory_space<vmem>>, vector<128x32xf32>
    %4 = tpu.iota {dimensions = array<i32: 0>} : vector<128x32xi32>
    %5 = tpu.iota {dimensions = array<i32: 1>} : vector<128x32xi32>
    %c-1640531535_i32 = arith.constant -1640531535 : i32
    %6 = vector.broadcast %c-1640531535_i32 : i32 to vector<128x32xi32>
    %7 = arith.muli %4, %6 : vector<128x32xi32>
    %c-2048144777_i32 = arith.constant -2048144777 : i32
    %8 = vector.broadcast %c-2048144777_i32 : i32 to vector<128x32xi32>
    %9 = arith.muli %5, %8 : vector<128x32xi32>
    %10 = arith.addi %7, %9 : vector<128x32xi32>
    %11 = vector.broadcast %2 : i32 to vector<128x32xi32>
    %12 = arith.addi %10, %11 : vector<128x32xi32>
    %c16_i32 = arith.constant 16 : i32
    %13 = vector.broadcast %c16_i32 : i32 to vector<128x32xi32>
    %14 = arith.shrui %12, %13 : vector<128x32xi32>
    %15 = arith.xori %12, %14 : vector<128x32xi32>
    %c2146121005_i32 = arith.constant 2146121005 : i32
    %16 = vector.broadcast %c2146121005_i32 : i32 to vector<128x32xi32>
    %17 = arith.muli %15, %16 : vector<128x32xi32>
    %c15_i32 = arith.constant 15 : i32
    %18 = vector.broadcast %c15_i32 : i32 to vector<128x32xi32>
    %19 = arith.shrui %17, %18 : vector<128x32xi32>
    %20 = arith.xori %17, %19 : vector<128x32xi32>
    %c-2073254261_i32 = arith.constant -2073254261 : i32
    %21 = vector.broadcast %c-2073254261_i32 : i32 to vector<128x32xi32>
    %22 = arith.muli %20, %21 : vector<128x32xi32>
    %c16_i32_2 = arith.constant 16 : i32
    %23 = vector.broadcast %c16_i32_2 : i32 to vector<128x32xi32>
    %24 = arith.shrui %22, %23 : vector<128x32xi32>
    %25 = arith.xori %22, %24 : vector<128x32xi32>
    %c16_i32_3 = arith.constant 16 : i32
    %26 = vector.broadcast %c16_i32_3 : i32 to vector<128x32xi32>
    %27 = arith.shrui %25, %26 : vector<128x32xi32>
    %c6554_i32 = arith.constant 6554 : i32
    %28 = vector.broadcast %c6554_i32 : i32 to vector<128x32xi32>
    %29 = arith.cmpi uge, %27, %28 : vector<128x32xi32>
    %c65535_i32 = arith.constant 65535 : i32
    %30 = vector.broadcast %c65535_i32 : i32 to vector<128x32xi32>
    %31 = arith.andi %25, %30 : vector<128x32xi32>
    %c6554_i32_4 = arith.constant 6554 : i32
    %32 = vector.broadcast %c6554_i32_4 : i32 to vector<128x32xi32>
    %33 = arith.cmpi uge, %31, %32 : vector<128x32xi32>
    %c0_5 = arith.constant 0 : index
    %c0_6 = arith.constant 0 : index
    %34 = vector.load %arg3[%c0_5, %c0_6] : memref<32x32xf32, #tpu.memory_space<vmem>>, vector<32x32xf32>
    %cst = arith.constant dense<0.000000e+00> : vector<128x32xf32>
    %35 = tpu.matmul %3, %34, %cst {dimension_numbers = #tpu.dot_dimension_numbers<[1], [0], [0], [1], [0, 0, 1, 1], [], []>} : vector<128x32xf32>, vector<32x32xf32>, vector<128x32xf32> -> vector<128x32xf32>
    %cst_7 = arith.constant 0.000000e+00 : f32
    %36 = vector.broadcast %cst_7 : f32 to vector<128x32xf32>
    %37 = arith.maximumf %35, %36 : vector<128x32xf32>
    %cst_8 = arith.constant 1.11111116 : f32
    %38 = vector.broadcast %cst_8 : f32 to vector<128x32xf32>
    %39 = arith.mulf %37, %38 : vector<128x32xf32>
    %cst_9 = arith.constant 0.000000e+00 : f32
    %40 = vector.broadcast %cst_9 : f32 to vector<128x32xf32>
    %41 = arith.select %29, %39, %40 : vector<128x32xi1>, vector<128x32xf32>
    %42 = arith.addf %41, %3 : vector<128x32xf32>
    %c0_10 = arith.constant 0 : index
    %c0_11 = arith.constant 0 : index
    %43 = vector.load %arg4[%c0_10, %c0_11] : memref<32x32xf32, #tpu.memory_space<vmem>>, vector<32x32xf32>
    %cst_12 = arith.constant dense<0.000000e+00> : vector<128x32xf32>
    %44 = tpu.matmul %42, %43, %cst_12 {dimension_numbers = #tpu.dot_dimension_numbers<[1], [0], [0], [1], [0, 0, 1, 1], [], []>} : vector<128x32xf32>, vector<32x32xf32>, vector<128x32xf32> -> vector<128x32xf32>
    %cst_13 = arith.constant 0.000000e+00 : f32
    %45 = vector.broadcast %cst_13 : f32 to vector<128x32xf32>
    %46 = arith.maximumf %44, %45 : vector<128x32xf32>
    %cst_14 = arith.constant 1.11111116 : f32
    %47 = vector.broadcast %cst_14 : f32 to vector<128x32xf32>
    %48 = arith.mulf %46, %47 : vector<128x32xf32>
    %cst_15 = arith.constant 0.000000e+00 : f32
    %49 = vector.broadcast %cst_15 : f32 to vector<128x32xf32>
    %50 = arith.select %33, %48, %49 : vector<128x32xi1>, vector<128x32xf32>
    %51 = arith.addf %50, %42 : vector<128x32xf32>
    %c0_16 = arith.constant 0 : index
    %c0_17 = arith.constant 0 : index
    %52 = vector.load %arg5[%c0_16, %c0_17] : memref<8x32xf32, #tpu.memory_space<vmem>>, vector<8x32xf32>
    "tpu.trace_start"() <{level = 10 : i32, message = "kd,nd->kn"}> : () -> ()
    %cst_18 = arith.constant dense<0.000000e+00> : vector<8x128xf32>
    %53 = tpu.matmul %52, %51, %cst_18 {dimension_numbers = #tpu.dot_dimension_numbers<[1], [1], [0], [0], [0, 0, 1, 0], [], []>} : vector<8x32xf32>, vector<128x32xf32>, vector<8x128xf32> -> vector<8x128xf32>
    "tpu.trace_stop"() : () -> ()
    %54 = vector.extract_strided_slice %53 {offsets = [0, 0], sizes = [1, 128], strides = [1, 1]} : vector<8x128xf32> to vector<1x128xf32>
    %cst_19 = arith.constant 0.000000e+00 : f32
    %55 = vector.broadcast %cst_19 : f32 to vector<1x128xf32>
    %56 = arith.subf %55, %54 : vector<1x128xf32>
    %57 = math.exp %56 : vector<1x128xf32>
    %cst_20 = arith.constant 1.000000e+00 : f32
    %58 = vector.broadcast %cst_20 : f32 to vector<1x128xf32>
    %59 = arith.addf %58, %57 : vector<1x128xf32>
    %cst_21 = arith.constant 1.000000e+00 : f32
    %60 = vector.broadcast %cst_21 : f32 to vector<1x128xf32>
    %61 = arith.divf %60, %59 : vector<1x128xf32>
    %c0_22 = arith.constant 0 : index
    %c0_23 = arith.constant 0 : index
    %62 = vector.load %arg6[%c0_22, %c0_23] : memref<1x128xf32, #tpu.memory_space<vmem>>, vector<1x128xf32>
    tpu.vector_store %arg6[%c0_22, %c0_23], %61 {strides = array<i32>} : memref<1x128xf32, #tpu.memory_space<vmem>>, vector<1x128xf32>,
    return
  }
  func.func @transform_0(%arg0: i32, %arg1: memref<1xi32, #tpu.memory_space<smem>>) -> (i32, i32) {
    %c0_i32 = arith.constant 0 : i32
    %c0_i32_0 = arith.constant 0 : i32
    return %arg0, %c0_i32 : i32, i32
  }
  func.func @transform_1(%arg0: i32, %arg1: memref<1xi32, #tpu.memory_space<smem>>) -> (i32, i32) {
    %c0_i32 = arith.constant 0 : i32
    %c0_i32_0 = arith.constant 0 : i32
    %c0_i32_1 = arith.constant 0 : i32
    return %c0_i32, %c0_i32_0 : i32, i32
  }
  func.func @transform_2(%arg0: i32, %arg1: memref<1xi32, #tpu.memory_space<smem>>) -> (i32, i32) {
    %c0_i32 = arith.constant 0 : i32
    %c0_i32_0 = arith.constant 0 : i32
    %c0_i32_1 = arith.constant 0 : i32
    return %c0_i32, %c0_i32_0 : i32, i32
  }
  func.func @transform_3(%arg0: i32, %arg1: memref<1xi32, #tpu.memory_space<smem>>) -> (i32, i32) {
    %c0_i32 = arith.constant 0 : i32
    %c0_i32_0 = arith.constant 0 : i32
    %c0_i32_1 = arith.constant 0 : i32
    return %c0_i32, %c0_i32_0 : i32, i32
  }
  func.func @transform_4(%arg0: i32, %arg1: memref<1xi32, #tpu.memory_space<smem>>) -> (i32, i32) {
    %c0_i32 = arith.constant 0 : i32
    %c0_i32_0 = arith.constant 0 : i32
    return %c0_i32, %arg0 : i32, i32
  }
}

</mosaic_0001>

<llo_original>
// kernel: tpu_custom_call.1
$region0: #{tpu_custom_call.1}
  #allocation0 [shape = 'u32[]', space=smem, size = 0x4, offset = 0x4, fixed_abs, tag = 'smem constant byte address 0x4 - core index']
  #allocation1 [shape = 'u32[72,128]{1,0:T(1,128)}', space=vmem, size = 0x9000, scoped, tag = 'internal scratch']
  #allocation2 [shape = 's32[1]{0}', space=sflag, size = 0x4, scoped, tag = 'scoped memory for tpu_custom_call.1']
  #allocation3 [shape = 's32[1]{0:T(128)S(6)}', space=smem, size = 0x200, scoped, tag = 'prefetched SMEM operand 0']
  %s0 = inlined_call_operand.<no memory space> [shape: s32[1], index: 0, kind: input, shape index: {}]
  %s1 = inlined_call_operand.vmem [shape: f32[256,32], index: 1, kind: input, shape index: {}]
  %s2 = inlined_call_operand.vmem [shape: f32[32,32], index: 2, kind: input, shape index: {}]
  %s3 = inlined_call_operand.vmem [shape: f32[32,32], index: 3, kind: input, shape index: {}]
  %s4 = inlined_call_operand.vmem [shape: f32[8,32], index: 4, kind: input, shape index: {}]
  %s5 = inlined_call_operand.hbm [shape: f32[1,256], index: 5, kind: output, shape index: {}]
  %s6 = sld [smem:[#allocation0]]
  $region49: #{tpu_custom_call.1} parent=0
    _
  %s8 = ssub.s32 1, %s6
  %s9 = scalar_select 0, %s8, %s6
  %10 = sst [smem:[#allocation3]] %s0
  $region1: #{tpu_custom_call.1} parent=0
    #allocation4 [shape = 'u8[1024]{0}', space=vmem, size = 0x400, scoped, tag = 'output window, operand 0']
    #allocation5 [shape = 's32[2]{0}', space=sflag, size = 0x8, scoped, tag = 'scoped memory for tpu_custom_call.1']
    %11 = vsyncpa [#allocation5], 0
    %s12 = scalar_lea.sflag [#allocation5], 1
    %13 = vsyncpa %s12, 0
    loop: start=0, step=1, limit=4
    $region2: #{tpu_custom_call.1} parent=1 // loop_pre_header
      _
    $region3: #{tpu_custom_call.1} parent=1 // loop_header
      %s15 = sphi 0, %s19
      %p16 = scmp.ge.s32.totalorder %s15, 4
      %s25 = sphi 0, %s27
      %s28 = sphi 0, %s25
      %s29 = sphi 0, %s28
      %s45 = sphi 0, %s29
      %s49 = sphi 0, %s49
      %s51 = sphi 0, %s49
      %s52 = sphi 0, %s51
      %s66 = sphi 0, %s52
      %s70 = sphi 0, %s70
      %s72 = sphi 0, %s70
      %s73 = sphi 0, %s72
      %s87 = sphi 0, %s73
      %s91 = sphi 0, %s91
      %s93 = sphi 0, %s91
      %s94 = sphi 0, %s93
      %s108 = sphi 0, %s94
      %s114 = sphi 0, %s116
      %s117 = sphi 0, %s114
      %s118 = sphi 0, %s117
      %s134 = sphi 0, %s118
    $region4: #{tpu_custom_call.1} parent=1 // loop_header_branch
      %18 = sbr.rel (%p16) target = $region8
    $region5: #{tpu_custom_call.1} parent=1 // loop_body
      %s20 = ssub.s32 %s15, 1
      %s21 = ssub.s32 %s15, 2
      %s22 = sadd.s32 %s15, 1
      %s23 = ssub.s32 %s15, %s22
      %p24 = scmp.eq.s32.totalorder %s23, 0
      %s26 = sadd.s32 %s25, 1
      %s27 = scalar_select %p24, %s25, %s26
      %p30 = pneg %p24
      %p31 = scmp.eq.s32.totalorder %s15, 1
      %p32 = por %p30, %p31
      %p33 = scmp.ne.s32.totalorder %s25, %s28
      %p34 = scmp.eq.s32.totalorder %s15, 0
      %p35 = por %p33, %p34
      %p36 = scmp.ne.s32.totalorder %s25, %s28
      %p37 = scmp.eq.s32.totalorder %s20, 1
      %p38 = por %p36, %p37
      %p39 = scmp.ne.s32.totalorder %s28, %s29
      %p40 = scmp.eq.s32.totalorder %s20, 0
      %p41 = por %p39, %p40
      %p42 = scmp.ne.s32.totalorder %s28, %s29
      %p43 = scmp.eq.s32.totalorder %s21, 1
      %p44 = por %p42, %p43
      %p46 = scmp.ne.s32.totalorder %s29, %s45
      %p47 = scmp.eq.s32.totalorder %s21, 0
      %p48 = por %p46, %p47
      %s50 = sadd.s32 %s49, 1
      %p53 = scmp.eq.s32.totalorder %s15, 1
      %p54 = scmp.ne.s32.totalorder %s49, %s51
      %p55 = scmp.eq.s32.totalorder %s15, 0
      %p56 = por %p54, %p55
      %p57 = scmp.ne.s32.totalorder %s49, %s51
      %p58 = scmp.eq.s32.totalorder %s20, 1
      %p59 = por %p57, %p58
      %p60 = scmp.ne.s32.totalorder %s51, %s52
      %p61 = scmp.eq.s32.totalorder %s20, 0
      %p62 = por %p60, %p61
      %p63 = scmp.ne.s32.totalorder %s51, %s52
      %p64 = scmp.eq.s32.totalorder %s21, 1
      %p65 = por %p63, %p64
      %p67 = scmp.ne.s32.totalorder %s52, %s66
      %p68 = scmp.eq.s32.totalorder %s21, 0
      %p69 = por %p67, %p68
      %s71 = sadd.s32 %s70, 1
      %p74 = scmp.eq.s32.totalorder %s15, 1
      %p75 = scmp.ne.s32.totalorder %s70, %s72
      %p76 = scmp.eq.s32.totalorder %s15, 0
      %p77 = por %p75, %p76
      %p78 = scmp.ne.s32.totalorder %s70, %s72
      %p79 = scmp.eq.s32.totalorder %s20, 1
      %p80 = por %p78, %p79
      %p81 = scmp.ne.s32.totalorder %s72, %s73
      %p82 = scmp.eq.s32.totalorder %s20, 0
      %p83 = por %p81, %p82
      %p84 = scmp.ne.s32.totalorder %s72, %s73
      %p85 = scmp.eq.s32.totalorder %s21, 1
      %p86 = por %p84, %p85
      %p88 = scmp.ne.s32.totalorder %s73, %s87
      %p89 = scmp.eq.s32.totalorder %s21, 0
      %p90 = por %p88, %p89
      %s92 = sadd.s32 %s91, 1
      %p95 = scmp.eq.s32.totalorder %s15, 1
      %p96 = scmp.ne.s32.totalorder %s91, %s93
      %p97 = scmp.eq.s32.totalorder %s15, 0
      %p98 = por %p96, %p97
      %p99 = scmp.ne.s32.totalorder %s91, %s93
      %p100 = scmp.eq.s32.totalorder %s20, 1
      %p101 = por %p99, %p100
      %p102 = scmp.ne.s32.totalorder %s93, %s94
      %p103 = scmp.eq.s32.totalorder %s20, 0
      %p104 = por %p102, %p103
      %p105 = scmp.ne.s32.totalorder %s93, %s94
      %p106 = scmp.eq.s32.totalorder %s21, 1
      %p107 = por %p105, %p106
      %p109 = scmp.ne.s32.totalorder %s94, %s108
      %p110 = scmp.eq.s32.totalorder %s21, 0
      %p111 = por %p109, %p110
      %s112 = ssub.s32 %s15, %s22
      %p113 = scmp.eq.s32.totalorder %s112, 0
      %s115 = sadd.s32 %s114, 1
      %s116 = scalar_select %p113, %s114, %s115
      %p119 = pneg %p113
      %p120 = scmp.eq.s32.totalorder %s15, 1
      %p121 = por %p119, %p120
      %p122 = scmp.ne.s32.totalorder %s114, %s117
      %p123 = scmp.eq.s32.totalorder %s15, 0
      %p124 = por %p122, %p123
      %p125 = scmp.ne.s32.totalorder %s114, %s117
      %p126 = scmp.eq.s32.totalorder %s20, 1
      %p127 = por %p125, %p126
      %p128 = scmp.ne.s32.totalorder %s117, %s118
      %p129 = scmp.eq.s32.totalorder %s20, 0
      %p130 = por %p128, %p129
      %p131 = scmp.ne.s32.totalorder %s117, %s118
      %p132 = scmp.eq.s32.totalorder %s21, 1
      %p133 = por %p131, %p132
      %p135 = scmp.ne.s32.totalorder %s118, %s134
      %p136 = scmp.eq.s32.totalorder %s21, 0
      %p137 = por %p135, %p136
      %p138 = scmp.le.s32.totalorder 1, %s15
      %p139 = scmp.lt.s32.totalorder %s15, 3
      %p140 = pnand %p138, %p139
      %p141 = pneg %p140
      // Predicated region
      $region9: #{tpu_custom_call.1} parent=5 // pred_check
        _
      $region10: #{tpu_custom_call.1} parent=5 // pred_check_branch
        %143 = sbr.rel (%p140) target = $region12
      $region11: #{tpu_custom_call.1} parent=5 // pred_region
        %s144 = ssub.s32 %s15, 1
        // Predicated region
        $region13: #{tpu_custom_call.1} parent=11 // pred_check
          %p145 = pneg %p62
        $region14: #{tpu_custom_call.1} parent=11 // pred_check_branch
          %147 = sbr.rel (%p145) target = $region16
        $region15: #{tpu_custom_call.1} parent=11 // pred_region
          _
        $region16: #{tpu_custom_call.1} parent=11 // pred_fallthru
          _
        // Predicated region
        $region17: #{tpu_custom_call.1} parent=11 // pred_check
          %p148 = pneg %p83
        $region18: #{tpu_custom_call.1} parent=11 // pred_check_branch
          %150 = sbr.rel (%p148) target = $region20
        $region19: #{tpu_custom_call.1} parent=11 // pred_region
          _
        $region20: #{tpu_custom_call.1} parent=11 // pred_fallthru
          _
        // Predicated region
        $region21: #{tpu_custom_call.1} parent=11 // pred_check
          %p151 = pneg %p104
        $region22: #{tpu_custom_call.1} parent=11 // pred_check_branch
          %153 = sbr.rel (%p151) target = $region24
        $region23: #{tpu_custom_call.1} parent=11 // pred_region
          _
        $region24: #{tpu_custom_call.1} parent=11 // pred_fallthru
          _
      $region12: #{tpu_custom_call.1} parent=5 // pred_fallthru
        _
      %p154 = scmp.lt.s32.totalorder %s15, 2
      // Predicated region
      $region25: #{tpu_custom_call.1} parent=5 // pred_check
        %p155 = pneg %p154
      $region26: #{tpu_custom_call.1} parent=5 // pred_check_branch
        %157 = sbr.rel (%p155) target = $region28
      $region27: #{tpu_custom_call.1} parent=5 // pred_region
        // Predicated region
        $region29: #{tpu_custom_call.1} parent=27 // pred_check
          %p158 = pneg %p35
        $region30: #{tpu_custom_call.1} parent=27 // pred_check_branch
          %160 = sbr.rel (%p158) target = $region32
        $region31: #{tpu_custom_call.1} parent=27 // pred_region
          %s161 = smul.u32 16, %s15
          %p162 = scmp.lt.s32.totalorder %s161, 31
          %s163 = scalar_select %p162, %s161, 31
          %s164 = smul.addr %s163, 8
          %s165 = scalar_lea.vmem %s1, %s164
          %s166 = smul.u32 16, %s15
        $region32: #{tpu_custom_call.1} parent=27 // pred_fallthru
          _
      $region28: #{tpu_custom_call.1} parent=5 // pred_fallthru
        _
      %p167 = scmp.le.s32.totalorder 1, %s15
      %p168 = scmp.lt.s32.totalorder %s15, 3
      %p169 = pnand %p167, %p168
      %p170 = pneg %p169
      // Predicated region
      $region33: #{tpu_custom_call.1} parent=5 // pred_check
        _
      $region34: #{tpu_custom_call.1} parent=5 // pred_check_branch
        %172 = sbr.rel (%p169) target = $region36
      $region35: #{tpu_custom_call.1} parent=5 // pred_region
        %s173 = ssub.s32 %s15, 1
        %s174 = smul.u32 16, %s20
        %p175 = scmp.lt.s32.totalorder %s174, 31
        %s176 = scalar_select %p175, %s174, 31
        %s177 = smul.addr %s176, 8
        %s178 = scalar_lea.vmem %s1, %s177
        %p179 = pneg %p41
        %p180 = pneg %p38
        %p181 = pneg %p62
        %p182 = pneg %p59
        %p183 = pneg %p83
        %p184 = pneg %p80
        %p185 = pneg %p104
        %p186 = pneg %p101
        %p187 = pneg %p130
        %p188 = pneg %p127
        %s189 = sand.u32 %s117, 1
        %s190 = scalar_lea.sflag [#allocation5], %s189
        %s191 = sand.u32 %s117, 1
        %s192 = scalar_lea.vmem [#allocation4], %s191
        %s193 = smul.u32 16, %s20
        %p194 = scmp.lt.s32.totalorder %s193, 31
        %s195 = scalar_select %p194, %s193, 31
        %s196 = smul.addr %s195, 8
        %s197 = scalar_lea.vmem %s1, %s196
        %s198 = smul.u32 16, %s20
        %s199 = sld [smem:[#allocation3]]
        %s200 = smul.u32 %s20, 2654435769
        %s201 = sxor.u32 %s199, %s200
        %v202 = vld [vmem:[%s197] sm:$0xff]
        %v203 = vld [vmem:[%s197 + $0x8] sm:$0xff]
        %v204 = vld [vmem:[%s197 + $0x10] sm:$0xff]
        %v205 = vld [vmem:[%s197 + $0x18] sm:$0xff]
        %v206 = vld [vmem:[%s197 + $0x20] sm:$0xff]
        %v207 = vld [vmem:[%s197 + $0x28] sm:$0xff]
        %v208 = vld [vmem:[%s197 + $0x30] sm:$0xff]
        %v209 = vld [vmem:[%s197 + $0x38] sm:$0xff]
        %v210 = vld [vmem:[%s197 + $0x40] sm:$0xff]
        %v211 = vld [vmem:[%s197 + $0x48] sm:$0xff]
        %v212 = vld [vmem:[%s197 + $0x50] sm:$0xff]
        %v213 = vld [vmem:[%s197 + $0x58] sm:$0xff]
        %v214 = vld [vmem:[%s197 + $0x60] sm:$0xff]
        %v215 = vld [vmem:[%s197 + $0x68] sm:$0xff]
        %v216 = vld [vmem:[%s197 + $0x70] sm:$0xff]
        %v217 = vld [vmem:[%s197 + $0x78] sm:$0xff]
        %v218 = vlaneseq
        %v219 = vshrl.u32 %v218, 7
        %v220 = vadd.s32 %v219, 8
        %v221 = vadd.s32 %v219, 16
        %v222 = vadd.s32 %v219, 24
        %v223 = vadd.s32 %v219, 32
        %v224 = vadd.s32 %v219, 40
        %v225 = vadd.s32 %v219, 48
        %v226 = vadd.s32 %v219, 56
        %v227 = vadd.s32 %v219, 64
        %v228 = vadd.s32 %v219, 72
        %v229 = vadd.s32 %v219, 80
        %v230 = vadd.s32 %v219, 88
        %v231 = vadd.s32 %v219, 96
        %v232 = vadd.s32 %v219, 104
        %v233 = vadd.s32 %v219, 112
        %v234 = vadd.s32 %v219, 120
        %v235 = vlaneseq
        %v236 = vand.u32 %v235, 127
        %v237 = vmul.u32 %v219, 2654435761
        %v238 = vmul.u32 %v220, 2654435761
        %v239 = vmul.u32 %v221, 2654435761
        %v240 = vmul.u32 %v222, 2654435761
        %v241 = vmul.u32 %v223, 2654435761
        %v242 = vmul.u32 %v224, 2654435761
        %v243 = vmul.u32 %v225, 2654435761
        %v244 = vmul.u32 %v226, 2654435761
        %v245 = vmul.u32 %v227, 2654435761
        %v246 = vmul.u32 %v228, 2654435761
        %v247 = vmul.u32 %v229, 2654435761
        %v248 = vmul.u32 %v230, 2654435761
        %v249 = vmul.u32 %v231, 2654435761
        %v250 = vmul.u32 %v232, 2654435761
        %v251 = vmul.u32 %v233, 2654435761
        %v252 = vmul.u32 %v234, 2654435761
        %v253 = vmul.u32 %v236, 2246822519
        %v254 = vadd.s32 %v237, %v253
        %v255 = vadd.s32 %v238, %v253
        %v256 = vadd.s32 %v239, %v253
        %v257 = vadd.s32 %v240, %v253
        %v258 = vadd.s32 %v241, %v253
        %v259 = vadd.s32 %v242, %v253
        %v260 = vadd.s32 %v243, %v253
        %v261 = vadd.s32 %v244, %v253
        %v262 = vadd.s32 %v245, %v253
        %v263 = vadd.s32 %v246, %v253
        %v264 = vadd.s32 %v247, %v253
        %v265 = vadd.s32 %v248, %v253
        %v266 = vadd.s32 %v249, %v253
        %v267 = vadd.s32 %v250, %v253
        %v268 = vadd.s32 %v251, %v253
        %v269 = vadd.s32 %v252, %v253
        %v270 = vstv %s201
        %v271 = vadd.s32 %v254, %v270
        %v272 = vadd.s32 %v255, %v270
        %v273 = vadd.s32 %v256, %v270
        %v274 = vadd.s32 %v257, %v270
        %v275 = vadd.s32 %v258, %v270
        %v276 = vadd.s32 %v259, %v270
        %v277 = vadd.s32 %v260, %v270
        %v278 = vadd.s32 %v261, %v270
        %v279 = vadd.s32 %v262, %v270
        %v280 = vadd.s32 %v263, %v270
        %v281 = vadd.s32 %v264, %v270
        %v282 = vadd.s32 %v265, %v270
        %v283 = vadd.s32 %v266, %v270
        %v284 = vadd.s32 %v267, %v270
        %v285 = vadd.s32 %v268, %v270
        %v286 = vadd.s32 %v269, %v270
        %v287 = vshrl.u32 %v271, 16
        %v288 = vshrl.u32 %v272, 16
        %v289 = vshrl.u32 %v273, 16
        %v290 = vshrl.u32 %v274, 16
        %v291 = vshrl.u32 %v275, 16
        %v292 = vshrl.u32 %v276, 16
        %v293 = vshrl.u32 %v277, 16
        %v294 = vshrl.u32 %v278, 16
        %v295 = vshrl.u32 %v279, 16
        %v296 = vshrl.u32 %v280, 16
        %v297 = vshrl.u32 %v281, 16
        %v298 = vshrl.u32 %v282, 16
        %v299 = vshrl.u32 %v283, 16
        %v300 = vshrl.u32 %v284, 16
        %v301 = vshrl.u32 %v285, 16
        %v302 = vshrl.u32 %v286, 16
        %v303 = vxor.u32 %v271, %v287
        %v304 = vxor.u32 %v272, %v288
        %v305 = vxor.u32 %v273, %v289
        %v306 = vxor.u32 %v274, %v290
        %v307 = vxor.u32 %v275, %v291
        %v308 = vxor.u32 %v276, %v292
        %v309 = vxor.u32 %v277, %v293
        %v310 = vxor.u32 %v278, %v294
        %v311 = vxor.u32 %v279, %v295
        %v312 = vxor.u32 %v280, %v296
        %v313 = vxor.u32 %v281, %v297
        %v314 = vxor.u32 %v282, %v298
        %v315 = vxor.u32 %v283, %v299
        %v316 = vxor.u32 %v284, %v300
        %v317 = vxor.u32 %v285, %v301
        %v318 = vxor.u32 %v286, %v302
        %v319 = vmul.u32 %v303, 2146121005
        %v320 = vmul.u32 %v304, 2146121005
        %v321 = vmul.u32 %v305, 2146121005
        %v322 = vmul.u32 %v306, 2146121005
        %v323 = vmul.u32 %v307, 2146121005
        %v324 = vmul.u32 %v308, 2146121005
        %v325 = vmul.u32 %v309, 2146121005
        %v326 = vmul.u32 %v310, 2146121005
        %v327 = vmul.u32 %v311, 2146121005
        %v328 = vmul.u32 %v312, 2146121005
        %v329 = vmul.u32 %v313, 2146121005
        %v330 = vmul.u32 %v314, 2146121005
        %v331 = vmul.u32 %v315, 2146121005
        %v332 = vmul.u32 %v316, 2146121005
        %v333 = vmul.u32 %v317, 2146121005
        %v334 = vmul.u32 %v318, 2146121005
        %v335 = vshrl.u32 %v319, 15
        %v336 = vshrl.u32 %v320, 15
        %v337 = vshrl.u32 %v321, 15
        %v338 = vshrl.u32 %v322, 15
        %v339 = vshrl.u32 %v323, 15
        %v340 = vshrl.u32 %v324, 15
        %v341 = vshrl.u32 %v325, 15
        %v342 = vshrl.u32 %v326, 15
        %v343 = vshrl.u32 %v327, 15
        %v344 = vshrl.u32 %v328, 15
        %v345 = vshrl.u32 %v329, 15
        %v346 = vshrl.u32 %v330, 15
        %v347 = vshrl.u32 %v331, 15
        %v348 = vshrl.u32 %v332, 15
        %v349 = vshrl.u32 %v333, 15
        %v350 = vshrl.u32 %v334, 15
        %v351 = vxor.u32 %v319, %v335
        %v352 = vxor.u32 %v320, %v336
        %v353 = vxor.u32 %v321, %v337
        %v354 = vxor.u32 %v322, %v338
        %v355 = vxor.u32 %v323, %v339
        %v356 = vxor.u32 %v324, %v340
        %v357 = vxor.u32 %v325, %v341
        %v358 = vxor.u32 %v326, %v342
        %v359 = vxor.u32 %v327, %v343
        %v360 = vxor.u32 %v328, %v344
        %v361 = vxor.u32 %v329, %v345
        %v362 = vxor.u32 %v330, %v346
        %v363 = vxor.u32 %v331, %v347
        %v364 = vxor.u32 %v332, %v348
        %v365 = vxor.u32 %v333, %v349
        %v366 = vxor.u32 %v334, %v350
        %v367 = vmul.u32 %v351, 2221713035
        %v368 = vmul.u32 %v352, 2221713035
        %v369 = vmul.u32 %v353, 2221713035
        %v370 = vmul.u32 %v354, 2221713035
        %v371 = vmul.u32 %v355, 2221713035
        %v372 = vmul.u32 %v356, 2221713035
        %v373 = vmul.u32 %v357, 2221713035
        %v374 = vmul.u32 %v358, 2221713035
        %v375 = vmul.u32 %v359, 2221713035
        %v376 = vmul.u32 %v360, 2221713035
        %v377 = vmul.u32 %v361, 2221713035
        %v378 = vmul.u32 %v362, 2221713035
        %v379 = vmul.u32 %v363, 2221713035
        %v380 = vmul.u32 %v364, 2221713035
        %v381 = vmul.u32 %v365, 2221713035
        %v382 = vmul.u32 %v366, 2221713035
        %v383 = vshrl.u32 %v367, 16
        %v384 = vshrl.u32 %v368, 16
        %v385 = vshrl.u32 %v369, 16
        %v386 = vshrl.u32 %v370, 16
        %v387 = vshrl.u32 %v371, 16
        %v388 = vshrl.u32 %v372, 16
        %v389 = vshrl.u32 %v373, 16
        %v390 = vshrl.u32 %v374, 16
        %v391 = vshrl.u32 %v375, 16
        %v392 = vshrl.u32 %v376, 16
        %v393 = vshrl.u32 %v377, 16
        %v394 = vshrl.u32 %v378, 16
        %v395 = vshrl.u32 %v379, 16
        %v396 = vshrl.u32 %v380, 16
        %v397 = vshrl.u32 %v381, 16
        %v398 = vshrl.u32 %v382, 16
        %v399 = vxor.u32 %v367, %v383
        %v400 = vxor.u32 %v368, %v384
        %v401 = vxor.u32 %v369, %v385
        %v402 = vxor.u32 %v370, %v386
        %v403 = vxor.u32 %v371, %v387
        %v404 = vxor.u32 %v372, %v388
        %v405 = vxor.u32 %v373, %v389
        %v406 = vxor.u32 %v374, %v390
        %v407 = vxor.u32 %v375, %v391
        %v408 = vxor.u32 %v376, %v392
        %v409 = vxor.u32 %v377, %v393
        %v410 = vxor.u32 %v378, %v394
        %v411 = vxor.u32 %v379, %v395
        %v412 = vxor.u32 %v380, %v396
        %v413 = vxor.u32 %v381, %v397
        %v414 = vxor.u32 %v382, %v398
        %v415 = vshrl.u32 %v399, 16
        %v416 = vshrl.u32 %v400, 16
        %v417 = vshrl.u32 %v401, 16
        %v418 = vshrl.u32 %v402, 16
        %v419 = vshrl.u32 %v403, 16
        %v420 = vshrl.u32 %v404, 16
        %v421 = vshrl.u32 %v405, 16
        %v422 = vshrl.u32 %v406, 16
        %v423 = vshrl.u32 %v407, 16
        %v424 = vshrl.u32 %v408, 16
        %v425 = vshrl.u32 %v409, 16
        %v426 = vshrl.u32 %v410, 16
        %v427 = vshrl.u32 %v411, 16
        %v428 = vshrl.u32 %v412, 16
        %v429 = vshrl.u32 %v413, 16
        %v430 = vshrl.u32 %v414, 16
        %v431 = vadd.s32 %v415, 2147483648
        %vm433 = vcmp.ge.s32.totalorder %v431, 2147490202
        %v434 = vadd.s32 %v416, 2147483648
        %vm436 = vcmp.ge.s32.totalorder %v434, 2147490202
        %v437 = vadd.s32 %v417, 2147483648
        %vm439 = vcmp.ge.s32.totalorder %v437, 2147490202
        %v440 = vadd.s32 %v418, 2147483648
        %vm442 = vcmp.ge.s32.totalorder %v440, 2147490202
        %v443 = vadd.s32 %v419, 2147483648
        %vm445 = vcmp.ge.s32.totalorder %v443, 2147490202
        %v446 = vadd.s32 %v420, 2147483648
        %vm448 = vcmp.ge.s32.totalorder %v446, 2147490202
        %v449 = vadd.s32 %v421, 2147483648
        %vm451 = vcmp.ge.s32.totalorder %v449, 2147490202
        %v452 = vadd.s32 %v422, 2147483648
        %vm454 = vcmp.ge.s32.totalorder %v452, 2147490202
        %v455 = vadd.s32 %v423, 2147483648
        %vm457 = vcmp.ge.s32.totalorder %v455, 2147490202
        %v458 = vadd.s32 %v424, 2147483648
        %vm460 = vcmp.ge.s32.totalorder %v458, 2147490202
        %v461 = vadd.s32 %v425, 2147483648
        %vm463 = vcmp.ge.s32.totalorder %v461, 2147490202
        %v464 = vadd.s32 %v426, 2147483648
        %vm466 = vcmp.ge.s32.totalorder %v464, 2147490202
        %v467 = vadd.s32 %v427, 2147483648
        %vm469 = vcmp.ge.s32.totalorder %v467, 2147490202
        %v470 = vadd.s32 %v428, 2147483648
        %vm472 = vcmp.ge.s32.totalorder %v470, 2147490202
        %v473 = vadd.s32 %v429, 2147483648
        %vm475 = vcmp.ge.s32.totalorder %v473, 2147490202
        %v476 = vadd.s32 %v430, 2147483648
        %vm478 = vcmp.ge.s32.totalorder %v476, 2147490202
        %v479 = vand.u32 %v399, 65535
        %v480 = vand.u32 %v400, 65535
        %v481 = vand.u32 %v401, 65535
        %v482 = vand.u32 %v402, 65535
        %v483 = vand.u32 %v403, 65535
        %v484 = vand.u32 %v404, 65535
        %v485 = vand.u32 %v405, 65535
        %v486 = vand.u32 %v406, 65535
        %v487 = vand.u32 %v407, 65535
        %v488 = vand.u32 %v408, 65535
        %v489 = vand.u32 %v409, 65535
        %v490 = vand.u32 %v410, 65535
        %v491 = vand.u32 %v411, 65535
        %v492 = vand.u32 %v412, 65535
        %v493 = vand.u32 %v413, 65535
        %v494 = vand.u32 %v414, 65535
        %v495 = vadd.s32 %v479, 2147483648
        %vm497 = vcmp.ge.s32.totalorder %v495, 2147490202
        %v498 = vadd.s32 %v480, 2147483648
        %vm500 = vcmp.ge.s32.totalorder %v498, 2147490202
        %v501 = vadd.s32 %v481, 2147483648
        %vm503 = vcmp.ge.s32.totalorder %v501, 2147490202
        %v504 = vadd.s32 %v482, 2147483648
        %vm506 = vcmp.ge.s32.totalorder %v504, 2147490202
        %v507 = vadd.s32 %v483, 2147483648
        %vm509 = vcmp.ge.s32.totalorder %v507, 2147490202
        %v510 = vadd.s32 %v484, 2147483648
        %vm512 = vcmp.ge.s32.totalorder %v510, 2147490202
        %v513 = vadd.s32 %v485, 2147483648
        %vm515 = vcmp.ge.s32.totalorder %v513, 2147490202
        %v516 = vadd.s32 %v486, 2147483648
        %vm518 = vcmp.ge.s32.totalorder %v516, 2147490202
        %v519 = vadd.s32 %v487, 2147483648
        %vm521 = vcmp.ge.s32.totalorder %v519, 2147490202
        %v522 = vadd.s32 %v488, 2147483648
        %vm524 = vcmp.ge.s32.totalorder %v522, 2147490202
        %v525 = vadd.s32 %v489, 2147483648
        %vm527 = vcmp.ge.s32.totalorder %v525, 2147490202
        %v528 = vadd.s32 %v490, 2147483648
        %vm530 = vcmp.ge.s32.totalorder %v528, 2147490202
        %v531 = vadd.s32 %v491, 2147483648
        %vm533 = vcmp.ge.s32.totalorder %v531, 2147490202
        %v534 = vadd.s32 %v492, 2147483648
        %vm536 = vcmp.ge.s32.totalorder %v534, 2147490202
        %v537 = vadd.s32 %v493, 2147483648
        %vm539 = vcmp.ge.s32.totalorder %v537, 2147490202
        %v540 = vadd.s32 %v494, 2147483648
        %vm542 = vcmp.ge.s32.totalorder %v540, 2147490202
        %v543 = vld [vmem:[%s2] sm:$0xff]
        %v544 = vld [vmem:[%s2 + $0x8] sm:$0xff]
        %v545 = vld [vmem:[%s2 + $0x10] sm:$0xff]
        %v546 = vld [vmem:[%s2 + $0x18] sm:$0xff]
        %vm547 = vcmask 261120
        %v549 = vsel %vm547, %v202, 0
        %v552 = vsel %vm547, %v203, 0
        %v555 = vsel %vm547, %v204, 0
        %v558 = vsel %vm547, %v205, 0
        %v561 = vsel %vm547, %v206, 0
        %v564 = vsel %vm547, %v207, 0
        %v567 = vsel %vm547, %v208, 0
        %v570 = vsel %vm547, %v209, 0
        %v573 = vsel %vm547, %v210, 0
        %v576 = vsel %vm547, %v211, 0
        %v579 = vsel %vm547, %v212, 0
        %v582 = vsel %vm547, %v213, 0
        %v585 = vsel %vm547, %v214, 0
        %v588 = vsel %vm547, %v215, 0
        %v591 = vsel %vm547, %v216, 0
        %v594 = vsel %vm547, %v217, 0
        %596 = vmatpush.msra.mxu0 0.0
        %597 = vmatpush.msra.mxu0 0.0
        %598 = vmatpush.msra.mxu0 0.0
        %599 = vmatpush.msra.mxu0 0.0
        %600 = vmatpush.msra.mxu0 0.0
        %601 = vmatpush.msra.mxu0 0.0
        %602 = vmatpush.msra.mxu0 0.0
        %603 = vmatpush.msra.mxu0 0.0
        %604 = vmatpush.msra.mxu0 0.0
        %605 = vmatpush.msra.mxu0 0.0
        %606 = vmatpush.msra.mxu0 0.0
        %607 = vmatpush.msra.mxu0 0.0
        %608 = vmatpush.msra.mxu0 %v546
        %609 = vmatpush.msra.mxu0 %v545
        %610 = vmatpush.msra.mxu0 %v544
        %611 = vmatpush.msra.mxu0 %v543
        %612 = vmatmul.f32.gmra.mxu0 %v549
        %v613 = vpop.f32.mrf.mxu0
        %v614 = vadd.f32 0.0, %v613
        %615 = vmatmul.f32.gmra.mxu0 %v552
        %v616 = vpop.f32.mrf.mxu0
        %v617 = vadd.f32 0.0, %v616
        %618 = vmatmul.f32.gmra.mxu0 %v555
        %v619 = vpop.f32.mrf.mxu0
        %v620 = vadd.f32 0.0, %v619
        %621 = vmatmul.f32.gmra.mxu0 %v558
        %v622 = vpop.f32.mrf.mxu0
        %v623 = vadd.f32 0.0, %v622
        %624 = vmatmul.f32.gmra.mxu0 %v561
        %v625 = vpop.f32.mrf.mxu0
        %v626 = vadd.f32 0.0, %v625
        %627 = vmatmul.f32.gmra.mxu0 %v564
        %v628 = vpop.f32.mrf.mxu0
        %v629 = vadd.f32 0.0, %v628
        %630 = vmatmul.f32.gmra.mxu0 %v567
        %v631 = vpop.f32.mrf.mxu0
        %v632 = vadd.f32 0.0, %v631
        %633 = vmatmul.f32.gmra.mxu0 %v570
        %v634 = vpop.f32.mrf.mxu0
        %v635 = vadd.f32 0.0, %v634
        %636 = vmatmul.f32.gmra.mxu0 %v573
        %v637 = vpop.f32.mrf.mxu0
        %v638 = vadd.f32 0.0, %v637
        %639 = vmatmul.f32.gmra.mxu0 %v576
        %v640 = vpop.f32.mrf.mxu0
        %v641 = vadd.f32 0.0, %v640
        %642 = vmatmul.f32.gmra.mxu0 %v579
        %v643 = vpop.f32.mrf.mxu0
        %v644 = vadd.f32 0.0, %v643
        %645 = vmatmul.f32.gmra.mxu0 %v582
        %v646 = vpop.f32.mrf.mxu0
        %v647 = vadd.f32 0.0, %v646
        %648 = vmatmul.f32.gmra.mxu0 %v585
        %v649 = vpop.f32.mrf.mxu0
        %v650 = vadd.f32 0.0, %v649
        %651 = vmatmul.f32.gmra.mxu0 %v588
        %v652 = vpop.f32.mrf.mxu0
        %v653 = vadd.f32 0.0, %v652
        %654 = vmatmul.f32.gmra.mxu0 %v591
        %v655 = vpop.f32.mrf.mxu0
        %v656 = vadd.f32 0.0, %v655
        %657 = vmatmul.f32.gmra.mxu0 %v594
        %v658 = vpop.f32.mrf.mxu0
        %v659 = vadd.f32 0.0, %v658
        %660 = vdwg.mxu0
        %v661 = vmax.f32 %v614, 0.0
        %v662 = vmax.f32 %v617, 0.0
        %v663 = vmax.f32 %v620, 0.0
        %v664 = vmax.f32 %v623, 0.0
        %v665 = vmax.f32 %v626, 0.0
        %v666 = vmax.f32 %v629, 0.0
        %v667 = vmax.f32 %v632, 0.0
        %v668 = vmax.f32 %v635, 0.0
        %v669 = vmax.f32 %v638, 0.0
        %v670 = vmax.f32 %v641, 0.0
        %v671 = vmax.f32 %v644, 0.0
        %v672 = vmax.f32 %v647, 0.0
        %v673 = vmax.f32 %v650, 0.0
        %v674 = vmax.f32 %v653, 0.0
        %v675 = vmax.f32 %v656, 0.0
        %v676 = vmax.f32 %v659, 0.0
        %v677 = vmul.f32 %v661, 1.1111112
        %v678 = vmul.f32 %v662, 1.1111112
        %v679 = vmul.f32 %v663, 1.1111112
        %v680 = vmul.f32 %v664, 1.1111112
        %v681 = vmul.f32 %v665, 1.1111112
        %v682 = vmul.f32 %v666, 1.1111112
        %v683 = vmul.f32 %v667, 1.1111112
        %v684 = vmul.f32 %v668, 1.1111112
        %v685 = vmul.f32 %v669, 1.1111112
        %v686 = vmul.f32 %v670, 1.1111112
        %v687 = vmul.f32 %v671, 1.1111112
        %v688 = vmul.f32 %v672, 1.1111112
        %v689 = vmul.f32 %v673, 1.1111112
        %v690 = vmul.f32 %v674, 1.1111112
        %v691 = vmul.f32 %v675, 1.1111112
        %v692 = vmul.f32 %v676, 1.1111112
        %v693 = vsel %vm433, %v677, 0.0
        %v694 = vsel %vm436, %v678, 0.0
        %v695 = vsel %vm439, %v679, 0.0
        %v696 = vsel %vm442, %v680, 0.0
        %v697 = vsel %vm445, %v681, 0.0
        %v698 = vsel %vm448, %v682, 0.0
        %v699 = vsel %vm451, %v683, 0.0
        %v700 = vsel %vm454, %v684, 0.0
        %v701 = vsel %vm457, %v685, 0.0
        %v702 = vsel %vm460, %v686, 0.0
        %v703 = vsel %vm463, %v687, 0.0
        %v704 = vsel %vm466, %v688, 0.0
        %v705 = vsel %vm469, %v689, 0.0
        %v706 = vsel %vm472, %v690, 0.0
        %v707 = vsel %vm475, %v691, 0.0
        %v708 = vsel %vm478, %v692, 0.0
        %v709 = vadd.f32 %v693, %v202
        %v710 = vadd.f32 %v694, %v203
        %v711 = vadd.f32 %v695, %v204
        %v712 = vadd.f32 %v696, %v205
        %v713 = vadd.f32 %v697, %v206
        %v714 = vadd.f32 %v698, %v207
        %v715 = vadd.f32 %v699, %v208
        %v716 = vadd.f32 %v700, %v209
        %v717 = vadd.f32 %v701, %v210
        %v718 = vadd.f32 %v702, %v211
        %v719 = vadd.f32 %v703, %v212
        %v720 = vadd.f32 %v704, %v213
        %v721 = vadd.f32 %v705, %v214
        %v722 = vadd.f32 %v706, %v215
        %v723 = vadd.f32 %v707, %v216
        %v724 = vadd.f32 %v708, %v217
        %v725 = vld [vmem:[%s3] sm:$0xff]
        %v726 = vld [vmem:[%s3 + $0x8] sm:$0xff]
        %v727 = vld [vmem:[%s3 + $0x10] sm:$0xff]
        %v728 = vld [vmem:[%s3 + $0x18] sm:$0xff]
        %v730 = vsel %vm547, %v709, 0
        %v733 = vsel %vm547, %v710, 0
        %v736 = vsel %vm547, %v711, 0
        %v739 = vsel %vm547, %v712, 0
        %v742 = vsel %vm547, %v713, 0
        %v745 = vsel %vm547, %v714, 0
        %v748 = vsel %vm547, %v715, 0
        %v751 = vsel %vm547, %v716, 0
        %v754 = vsel %vm547, %v717, 0
        %v757 = vsel %vm547, %v718, 0
        %v760 = vsel %vm547, %v719, 0
        %v763 = vsel %vm547, %v720, 0
        %v766 = vsel %vm547, %v721, 0
        %v769 = vsel %vm547, %v722, 0
        %v772 = vsel %vm547, %v723, 0
        %v775 = vsel %vm547, %v724, 0
        %777 = vmatpush.msra.mxu0 0.0
        %778 = vmatpush.msra.mxu0 0.0
        %779 = vmatpush.msra.mxu0 0.0
        %780 = vmatpush.msra.mxu0 0.0
        %781 = vmatpush.msra.mxu0 0.0
        %782 = vmatpush.msra.mxu0 0.0
        %783 = vmatpush.msra.mxu0 0.0
        %784 = vmatpush.msra.mxu0 0.0
        %785 = vmatpush.msra.mxu0 0.0
        %786 = vmatpush.msra.mxu0 0.0
        %787 = vmatpush.msra.mxu0 0.0
        %788 = vmatpush.msra.mxu0 0.0
        %789 = vmatpush.msra.mxu0 %v728
        %790 = vmatpush.msra.mxu0 %v727
        %791 = vmatpush.msra.mxu0 %v726
        %792 = vmatpush.msra.mxu0 %v725
        %793 = vmatmul.f32.gmra.mxu0 %v730
        %v794 = vpop.f32.mrf.mxu0
        %v795 = vadd.f32 0.0, %v794
        %796 = vmatmul.f32.gmra.mxu0 %v733
        %v797 = vpop.f32.mrf.mxu0
        %v798 = vadd.f32 0.0, %v797
        %799 = vmatmul.f32.gmra.mxu0 %v736
        %v800 = vpop.f32.mrf.mxu0
        %v801 = vadd.f32 0.0, %v800
        %802 = vmatmul.f32.gmra.mxu0 %v739
        %v803 = vpop.f32.mrf.mxu0
        %v804 = vadd.f32 0.0, %v803
        %805 = vmatmul.f32.gmra.mxu0 %v742
        %v806 = vpop.f32.mrf.mxu0
        %v807 = vadd.f32 0.0, %v806
        %808 = vmatmul.f32.gmra.mxu0 %v745
        %v809 = vpop.f32.mrf.mxu0
        %v810 = vadd.f32 0.0, %v809
        %811 = vmatmul.f32.gmra.mxu0 %v748
        %v812 = vpop.f32.mrf.mxu0
        %v813 = vadd.f32 0.0, %v812
        %814 = vmatmul.f32.gmra.mxu0 %v751
        %v815 = vpop.f32.mrf.mxu0
        %v816 = vadd.f32 0.0, %v815
        %817 = vmatmul.f32.gmra.mxu0 %v754
        %v818 = vpop.f32.mrf.mxu0
        %v819 = vadd.f32 0.0, %v818
        %820 = vmatmul.f32.gmra.mxu0 %v757
        %v821 = vpop.f32.mrf.mxu0
        %v822 = vadd.f32 0.0, %v821
        %823 = vmatmul.f32.gmra.mxu0 %v760
        %v824 = vpop.f32.mrf.mxu0
        %v825 = vadd.f32 0.0, %v824
        %826 = vmatmul.f32.gmra.mxu0 %v763
        %v827 = vpop.f32.mrf.mxu0
        %v828 = vadd.f32 0.0, %v827
        %829 = vmatmul.f32.gmra.mxu0 %v766
        %v830 = vpop.f32.mrf.mxu0
        %v831 = vadd.f32 0.0, %v830
        %832 = vmatmul.f32.gmra.mxu0 %v769
        %v833 = vpop.f32.mrf.mxu0
        %v834 = vadd.f32 0.0, %v833
        %835 = vmatmul.f32.gmra.mxu0 %v772
        %v836 = vpop.f32.mrf.mxu0
        %v837 = vadd.f32 0.0, %v836
        %838 = vmatmul.f32.gmra.mxu0 %v775
        %v839 = vpop.f32.mrf.mxu0
        %v840 = vadd.f32 0.0, %v839
        %841 = vdwg.mxu0
        %v842 = vmax.f32 %v795, 0.0
        %v843 = vmax.f32 %v798, 0.0
        %v844 = vmax.f32 %v801, 0.0
        %v845 = vmax.f32 %v804, 0.0
        %v846 = vmax.f32 %v807, 0.0
        %v847 = vmax.f32 %v810, 0.0
        %v848 = vmax.f32 %v813, 0.0
        %v849 = vmax.f32 %v816, 0.0
        %v850 = vmax.f32 %v819, 0.0
        %v851 = vmax.f32 %v822, 0.0
        %v852 = vmax.f32 %v825, 0.0
        %v853 = vmax.f32 %v828, 0.0
        %v854 = vmax.f32 %v831, 0.0
        %v855 = vmax.f32 %v834, 0.0
        %v856 = vmax.f32 %v837, 0.0
        %v857 = vmax.f32 %v840, 0.0
        %v858 = vmul.f32 %v842, 1.1111112
        %v859 = vmul.f32 %v843, 1.1111112
        %v860 = vmul.f32 %v844, 1.1111112
        %v861 = vmul.f32 %v845, 1.1111112
        %v862 = vmul.f32 %v846, 1.1111112
        %v863 = vmul.f32 %v847, 1.1111112
        %v864 = vmul.f32 %v848, 1.1111112
        %v865 = vmul.f32 %v849, 1.1111112
        %v866 = vmul.f32 %v850, 1.1111112
        %v867 = vmul.f32 %v851, 1.1111112
        %v868 = vmul.f32 %v852, 1.1111112
        %v869 = vmul.f32 %v853, 1.1111112
        %v870 = vmul.f32 %v854, 1.1111112
        %v871 = vmul.f32 %v855, 1.1111112
        %v872 = vmul.f32 %v856, 1.1111112
        %v873 = vmul.f32 %v857, 1.1111112
        %v874 = vsel %vm497, %v858, 0.0
        %v875 = vsel %vm500, %v859, 0.0
        %v876 = vsel %vm503, %v860, 0.0
        %v877 = vsel %vm506, %v861, 0.0
        %v878 = vsel %vm509, %v862, 0.0
        %v879 = vsel %vm512, %v863, 0.0
        %v880 = vsel %vm515, %v864, 0.0
        %v881 = vsel %vm518, %v865, 0.0
        %v882 = vsel %vm521, %v866, 0.0
        %v883 = vsel %vm524, %v867, 0.0
        %v884 = vsel %vm527, %v868, 0.0
        %v885 = vsel %vm530, %v869, 0.0
        %v886 = vsel %vm533, %v870, 0.0
        %v887 = vsel %vm536, %v871, 0.0
        %v888 = vsel %vm539, %v872, 0.0
        %v889 = vsel %vm542, %v873, 0.0
        %v890 = vadd.f32 %v874, %v709
        %v891 = vadd.f32 %v875, %v710
        %v892 = vadd.f32 %v876, %v711
        %v893 = vadd.f32 %v877, %v712
        %v894 = vadd.f32 %v878, %v713
        %v895 = vadd.f32 %v879, %v714
        %v896 = vadd.f32 %v880, %v715
        %v897 = vadd.f32 %v881, %v716
        %v898 = vadd.f32 %v882, %v717
        %v899 = vadd.f32 %v883, %v718
        %v900 = vadd.f32 %v884, %v719
        %v901 = vadd.f32 %v885, %v720
        %v902 = vadd.f32 %v886, %v721
        %v903 = vadd.f32 %v887, %v722
        %v904 = vadd.f32 %v888, %v723
        %v905 = vadd.f32 %v889, %v724
        %v906 = vld [vmem:[%s4] sm:$0xff]
        %v908 = vsel %vm547, %v906, 0
        %v911 = vsel %vm547, %v890, 0
        %v914 = vsel %vm547, %v891, 0
        %v917 = vsel %vm547, %v892, 0
        %v920 = vsel %vm547, %v893, 0
        %v923 = vsel %vm547, %v894, 0
        %v926 = vsel %vm547, %v895, 0
        %v929 = vsel %vm547, %v896, 0
        %v932 = vsel %vm547, %v897, 0
        %v935 = vsel %vm547, %v898, 0
        %v938 = vsel %vm547, %v899, 0
        %v941 = vsel %vm547, %v900, 0
        %v944 = vsel %vm547, %v901, 0
        %v947 = vsel %vm547, %v902, 0
        %v950 = vsel %vm547, %v903, 0
        %v953 = vsel %vm547, %v904, 0
        %v956 = vsel %vm547, %v905, 0
        %958 = vmatpush.xpose.msra.mxu0 %v956
        %959 = vmatpush.xpose.msra.mxu0 %v953
        %960 = vmatpush.xpose.msra.mxu0 %v950
        %961 = vmatpush.xpose.msra.mxu0 %v947
        %962 = vmatpush.xpose.msra.mxu0 %v944
        %963 = vmatpush.xpose.msra.mxu0 %v941
        %964 = vmatpush.xpose.msra.mxu0 %v938
        %965 = vmatpush.xpose.msra.mxu0 %v935
        %966 = vmatpush.xpose.msra.mxu0 %v932
        %967 = vmatpush.xpose.msra.mxu0 %v929
        %968 = vmatpush.xpose.msra.mxu0 %v926
        %969 = vmatpush.xpose.msra.mxu0 %v923
        %970 = vmatpush.xpose.msra.mxu0 %v920
        %971 = vmatpush.xpose.msra.mxu0 %v917
        %972 = vmatpush.xpose.msra.mxu0 %v914
        %973 = vmatpush.xpose.msra.mxu0 %v911
        %974 = vmatmul.f32.gmra.mxu0 %v908
        %v975 = vpop.f32.mrf.mxu0
        %v976 = vadd.f32 0.0, %v975
        %977 = vdwg.mxu0
        %v978 = vsub.f32 0.0, %v976
        %v979 = vmul.f32 %v978, 1.442695
        %v980 = vpow.pop %v979
        %v981 = vadd.f32 %v980, 1.0
        %v982 = vrcp.pop %v981
        %v983 = vmul.f32 %v981, %v982
        %v984 = vsub.f32 1.0, %v983
        %v985 = vmul.f32 %v982, %v984
        %v986 = vadd.f32 %v982, %v985
        %vm987 = vweird.f32 %v981
        %vm988 = vweird.f32 %v982
        %vm989 = vmor %vm987, %vm988
        %v990 = vsel %vm989, %v982, %v986
        %v991 = vand.u32 2147483647, %v981
        %vm992 = vcmp.eq.f32.partialorder %v991, 8.507059e+37
        %v993 = vand.u32 %v981, 2147483648
        %v994 = vor.u32 1.1754944e-38, %v993
        %v995 = vsel %vm992, %v994, %v990
        %v996 = vmul.f32 1.0, %v995
        %997 = vst [vmem:[%s192] sm:$0x1] %v996
        %s998 = sand.u32 %s117, 1
        %s999 = scalar_lea.sflag [#allocation5], %s998
        %s1000 = sand.u32 %s117, 1
        %s1001 = scalar_lea.vmem [#allocation4], %s1000
        // Predicated region
        $region37: #{tpu_custom_call.1} parent=35 // pred_check
          %p1002 = pneg %p127
        $region38: #{tpu_custom_call.1} parent=35 // pred_check_branch
          %1004 = sbr.rel (%p1002) target = $region40
        $region39: #{tpu_custom_call.1} parent=35 // pred_region
          %1006 = vsyncadd %s999, 0
          %s1007 = scalar_lea.hbm %s5, %s20
          %s1009 = sshll.u32 %s1001, 4
          %s1010 = int_to_ptr.vmem [resolvable:$true] %s1009
          %s1011 = sshll.u32 %s1007, 4
          %s1012 = int_to_ptr.hbm [resolvable:$true] %s1011
          %1014 = dma.vmem_to_hbm [thread:$0]  %s1010, 16, %s1012, %s999
        $region40: #{tpu_custom_call.1} parent=35 // pred_fallthru
          _
      $region36: #{tpu_custom_call.1} parent=5 // pred_fallthru
        _
      %p1015 = scmp.le.s32.totalorder 2, %s15
      // Predicated region
      $region41: #{tpu_custom_call.1} parent=5 // pred_check
        %p1016 = pneg %p1015
      $region42: #{tpu_custom_call.1} parent=5 // pred_check_branch
        %1018 = sbr.rel (%p1016) target = $region44
      $region43: #{tpu_custom_call.1} parent=5 // pred_region
        %s1019 = ssub.s32 %s15, 2
        // Predicated region
        $region45: #{tpu_custom_call.1} parent=43 // pred_check
          %p1020 = pneg %p133
        $region46: #{tpu_custom_call.1} parent=43 // pred_check_branch
          %1022 = sbr.rel (%p1020) target = $region48
        $region47: #{tpu_custom_call.1} parent=43 // pred_region
          %s1023 = sand.u32 %s118, 1
          %s1024 = scalar_lea.sflag [#allocation5], %s1023
          %s1025 = sand.u32 %s118, 1
          %s1026 = scalar_lea.vmem [#allocation4], %s1025
          %1028 = dma.done %s1024, 16
        $region48: #{tpu_custom_call.1} parent=43 // pred_fallthru
          _
      $region44: #{tpu_custom_call.1} parent=5 // pred_fallthru
        _
    $region6: #{tpu_custom_call.1} parent=1 // loop_footer
      %s19 = sadd.s32 1, %s15
    $region7: #{tpu_custom_call.1} parent=1 // loop_footer_branch
      %14 = sbr.rel target = $region3
    $region8: #{tpu_custom_call.1} parent=1 // loop_exit
      _
    %1029 = vsyncpa [#allocation5], 1
    %s1030 = scalar_lea.sflag [#allocation5], 1
    %1031 = vsyncpa %s1030, 1

</llo_original>
